<compile_context>
chip_gen: v5e
topology: v5e:2x2
jax: 0.10.0
libtpu: 0.0.40
codegen_flags: <defaults>
</compile_context>

<pallas_src>
import functools

import jax
import jax.numpy as jnp
from jax.experimental import pallas as pl
from jax.experimental.pallas import tpu as pltpu


# --------------------------------------------------------------------------- #
# Kernel
# --------------------------------------------------------------------------- #
def _fused_mlp_kernel(*refs, n_layers: int):
    # refs layout: x_ref, (w_ref, b_ref) * n_layers, o_ref
    x_ref = refs[0]
    o_ref = refs[-1]

    h = x_ref[...]
    for i in range(n_layers):
        w_ref = refs[1 + 2 * i]      # (in_f_i, out_f_i) -- pre-transposed, bf16/f32
        b_ref = refs[2 + 2 * i]      # (1, out_f_i)      -- f32
        # Feed the MXU in the weight dtype (bf16 by default), accumulate in f32.
        h = jnp.dot(h.astype(w_ref.dtype), w_ref[...],
                    preferred_element_type=jnp.float32)
        h = h + b_ref[...].astype(jnp.float32)          # f32 bias add
        if i != n_layers - 1:
            h = jnp.maximum(h, 0.0)                     # f32 ReLU on hidden layers
    o_ref[...] = h.astype(o_ref.dtype)


# --------------------------------------------------------------------------- #
# Wrapper helpers
# --------------------------------------------------------------------------- #
def _round_up(x: int, m: int) -> int:
    return ((x + m - 1) // m) * m


def _choose_batch_tile(batch: int, tile_b: int) -> int:
    """Batch tile: multiple of 8 sublanes, capped at tile_b; >=2 grid steps
    for large batches so v7x's two TensorCores both get work."""
    tile = max(8, _round_up(min(tile_b, _round_up(batch, 8)), 8))
    if batch >= 1024 and pl.cdiv(batch, tile) < 2:
        tile = _round_up(pl.cdiv(batch, 2), 8)
    return tile


def _vmem_budget_bytes(tile_b, in_f, out_f, x_dtype, prepped_params) -> int:
    """Lane-padded VMEM estimate (double-buffered blocks + f32 activations)."""
    def padded(rows, cols, itemsize):
        return _round_up(max(rows, 1), 8) * _round_up(max(cols, 1), 128) * itemsize

    x_isz = jnp.dtype(x_dtype).itemsize
    total = 2 * padded(tile_b, in_f, x_isz)          # x tile (double-buffered)
    total += 2 * padded(tile_b, out_f, x_isz)        # output tile
    for w, b in prepped_params:
        total += 2 * padded(w.shape[0], w.shape[1], jnp.dtype(w.dtype).itemsize)
        total += 2 * padded(1, b.shape[1], jnp.dtype(b.dtype).itemsize)
        total += padded(tile_b, w.shape[1], 4)       # f32 intermediate activation
    total = int(total * 1.5) + (2 << 20)             # compiler-temp headroom
    # Keep within every generation's physical VMEM (v7x: 64 MiB per TC).
    return min(max(total, 16 << 20), 60 << 20)


def prepare_pallas_params(params, compute_dtype=jnp.bfloat16):
    """One-time layout/dtype prep: W -> (in_f, out_f) in compute_dtype (bf16 by
    default for the MXU), bias -> (1, out_f) kept in f32 for the f32 epilogue."""
    prepped = []
    for w, b in params:  # torch layout: w (out_f, in_f), b (out_f,)
        prepped.append((w.T.astype(compute_dtype),
                        b.reshape(1, -1).astype(jnp.float32)))
    return prepped


def mlp_forward_pallas(prepped_params, x, *, tile_b: int = 1024):
    """Fused MLP forward. prepped_params: list of (W^T (in_f,out_f), b (1,out_f))."""
    B, in_f = x.shape
    n_layers = len(prepped_params)
    out_f = prepped_params[-1][0].shape[1]

    tile_b = _choose_batch_tile(B, tile_b)
    num_tiles = pl.cdiv(B, tile_b)   # ragged last block handled by Pallas masking

    in_specs = [pl.BlockSpec((tile_b, in_f), lambda i: (i, 0))]
    flat_args = [x]
    for w_t, b2 in prepped_params:
        k_in, k_out = w_t.shape
        # Weights/biases: full-array resident blocks, same block for every tile.
        in_specs.append(pl.BlockSpec((k_in, k_out), lambda i: (0, 0)))
        in_specs.append(pl.BlockSpec((1, k_out), lambda i: (0, 0)))
        flat_args += [w_t, b2]

    out_specs = pl.BlockSpec((tile_b, out_f), lambda i: (i, 0))

    flops = int(sum(2 * B * w.shape[0] * w.shape[1] for w, _ in prepped_params))
    bytes_accessed = int(
        x.size * x.dtype.itemsize
        + sum(w.size * w.dtype.itemsize + b.size * b.dtype.itemsize
              for w, b in prepped_params)
        + B * out_f * x.dtype.itemsize
    )

    return pl.pallas_call(
        functools.partial(_fused_mlp_kernel, n_layers=n_layers),
        out_shape=jax.ShapeDtypeStruct((B, out_f), x.dtype),
        grid=(num_tiles,),
        in_specs=in_specs,
        out_specs=out_specs,
        compiler_params=pltpu.CompilerParams(
            dimension_semantics=("parallel",),
            vmem_limit_bytes=_vmem_budget_bytes(
                tile_b, in_f, out_f, x.dtype, prepped_params),
        ),
        cost_estimate=pl.CostEstimate(
            flops=flops, transcendentals=0, bytes_accessed=bytes_accessed
        ),
    )(*flat_args)


# --------------------------------------------------------------------------- #
# Reference / init (torch.nn.Linear semantics)
# --------------------------------------------------------------------------- #
def init_mlp_params(key, n_inputs, n_hidden, n_outputs, dtype=jnp.float32):
    """Deterministic init matching torch.nn.Linear's U(-1/sqrt(fan_in), 1/sqrt(fan_in))."""
    dims = [n_inputs] + list(n_hidden) + [n_outputs]
    params = []
    for i in range(1, len(dims)):
        fan_in, fan_out = dims[i - 1], dims[i]
        key, kw, kb = jax.random.split(key, 3)
        bound = 1.0 / jnp.sqrt(jnp.asarray(fan_in, dtype))
        w = jax.random.uniform(kw, (fan_out, fan_in), dtype, -bound, bound)
        b = jax.random.uniform(kb, (fan_out,), dtype, -bound, bound)
        params.append((w, b))
    return params


def mlp_reference(params, x):
    """Pure-JAX reference with torch.nn.Linear semantics."""
    out = x
    n_layers = len(params)
    for idx, (w, b) in enumerate(params):
        out = out @ w.T + b
        if idx != n_layers - 1:
            out = jnp.maximum(out, 0.0)
    return out


# --------------------------------------------------------------------------- #
# Self-test
# --------------------------------------------------------------------------- #
if __name__ == "__main__":
    # Shapes consistent with the module: MLP(n_inputs=32, n_hidden=[64, 32], n_outputs=8)
    n_inputs, n_hidden, n_outputs = 32, [64, 32], 8

    key = jax.random.PRNGKey(0)
    key, kx = jax.random.split(key)
    params = init_mlp_params(key, n_inputs, n_hidden, n_outputs)
    ref_fn = functools.partial(mlp_reference, params)

    # 1) Small aligned batch, default bf16 MXU feed.
    batch = 8
    x = jax.random.normal(kx, (batch, n_inputs), jnp.float32)
    prepped_bf16 = prepare_pallas_params(params, compute_dtype=jnp.bfloat16)
    out = jax.block_until_ready(mlp_forward_pallas(prepped_bf16, x))
    ref = ref_fn(x)
    assert out.shape == (batch, n_outputs)
    assert jnp.allclose(out, ref, atol=2e-2, rtol=2e-2), "bf16-feed mismatch vs. reference"

    # 2) f32 feed path (tight tolerance, matches previous behavior).
    prepped_f32 = prepare_pallas_params(params, compute_dtype=jnp.float32)
    out_f32 = jax.block_until_ready(mlp_forward_pallas(prepped_f32, x))
    assert jnp.allclose(out_f32, ref, atol=1e-4, rtol=1e-4), "f32 mismatch vs. reference"

    # 3) Ragged batch exercising the no-pad partial-last-block path (4 tiles of 16).
    key, kx2 = jax.random.split(key)
    x_ragged = jax.random.normal(kx2, (50, n_inputs), jnp.float32)
    out_r = jax.block_until_ready(mlp_forward_pallas(prepped_bf16, x_ragged, tile_b=16))
    ref_r = ref_fn(x_ragged)
    assert out_r.shape == (50, n_outputs)
    assert jnp.allclose(out_r, ref_r, atol=2e-2, rtol=2e-2), "ragged-batch mismatch"

    print("KERNEL_OK")
</pallas_src>

<mosaic_0001>
module attributes {stable_mosaic.version = 11 : i64} {
  func.func @_fused_mlp_kernel(%arg0: i32, %arg1: memref<8x32xf32, #tpu.memory_space<vmem>>, %arg2: memref<32x64xbf16, #tpu.memory_space<vmem>>, %arg3: memref<1x64xf32, #tpu.memory_space<vmem>>, %arg4: memref<64x32xbf16, #tpu.memory_space<vmem>>, %arg5: memref<1x32xf32, #tpu.memory_space<vmem>>, %arg6: memref<32x8xbf16, #tpu.memory_space<vmem>>, %arg7: memref<1x8xf32, #tpu.memory_space<vmem>>, %arg8: memref<8x8xf32, #tpu.memory_space<vmem>>) attributes {dimension_semantics = [#tpu.dimension_semantics<parallel>], iteration_bounds = array<i64: 1>, scalar_prefetch = 0 : i64, scratch_operands = 0 : i64, tpu.core_type = #tpu.core_type<tc>, window_params = [{transform_indices = @transform_0, window_bounds = array<i64: 8, 32>}, {pipeline_mode = #tpu.pipeline_mode<synchronous>, transform_indices = @transform_1, window_bounds = array<i64: 32, 64>}, {pipeline_mode = #tpu.pipeline_mode<synchronous>, transform_indices = @transform_2, window_bounds = array<i64: 1, 64>}, {pipeline_mode = #tpu.pipeline_mode<synchronous>, transform_indices = @transform_3, window_bounds = array<i64: 64, 32>}, {pipeline_mode = #tpu.pipeline_mode<synchronous>, transform_indices = @transform_4, window_bounds = array<i64: 1, 32>}, {pipeline_mode = #tpu.pipeline_mode<synchronous>, transform_indices = @transform_5, window_bounds = array<i64: 32, 8>}, {pipeline_mode = #tpu.pipeline_mode<synchronous>, transform_indices = @transform_6, window_bounds = array<i64: 1, 8>}, {transform_indices = @transform_7, window_bounds = array<i64: 8, 8>}]} {
    %c0 = arith.constant 0 : index
    %c0_0 = arith.constant 0 : index
    %0 = vector.load %arg1[%c0, %c0_0] : memref<8x32xf32, #tpu.memory_space<vmem>>, vector<8x32xf32>
    %1 = arith.truncf %0 : vector<8x32xf32> to vector<8x32xbf16>
    %c0_1 = arith.constant 0 : index
    %c0_2 = arith.constant 0 : index
    %2 = vector.load %arg2[%c0_1, %c0_2] : memref<32x64xbf16, #tpu.memory_space<vmem>>, vector<32x64xbf16>
    %cst = arith.constant dense<0.000000e+00> : vector<8x64xf32>
    %3 = tpu.matmul %1, %2, %cst {dimension_numbers = #tpu.dot_dimension_numbers<[1], [0], [0], [1], [0, 0, 1, 1], [], []>} : vector<8x32xbf16>, vector<32x64xbf16>, vector<8x64xf32> -> vector<8x64xf32>
    %c0_3 = arith.constant 0 : index
    %c0_4 = arith.constant 0 : index
    %4 = vector.load %arg3[%c0_3, %c0_4] : memref<1x64xf32, #tpu.memory_space<vmem>>, vector<1x64xf32>
    %5 = vector.broadcast %4 : vector<1x64xf32> to vector<8x64xf32>
    %6 = arith.addf %3, %5 : vector<8x64xf32>
    %cst_5 = arith.constant 0.000000e+00 : f32
    %7 = vector.broadcast %cst_5 : f32 to vector<8x64xf32>
    %8 = arith.maximumf %6, %7 : vector<8x64xf32>
    %9 = arith.truncf %8 : vector<8x64xf32> to vector<8x64xbf16>
    %c0_6 = arith.constant 0 : index
    %c0_7 = arith.constant 0 : index
    %10 = vector.load %arg4[%c0_6, %c0_7] : memref<64x32xbf16, #tpu.memory_space<vmem>>, vector<64x32xbf16>
    %cst_8 = arith.constant dense<0.000000e+00> : vector<8x32xf32>
    %11 = tpu.matmul %9, %10, %cst_8 {dimension_numbers = #tpu.dot_dimension_numbers<[1], [0], [0], [1], [0, 0, 1, 1], [], []>} : vector<8x64xbf16>, vector<64x32xbf16>, vector<8x32xf32> -> vector<8x32xf32>
    %c0_9 = arith.constant 0 : index
    %c0_10 = arith.constant 0 : index
    %12 = vector.load %arg5[%c0_9, %c0_10] : memref<1x32xf32, #tpu.memory_space<vmem>>, vector<1x32xf32>
    %13 = vector.broadcast %12 : vector<1x32xf32> to vector<8x32xf32>
    %14 = arith.addf %11, %13 : vector<8x32xf32>
    %cst_11 = arith.constant 0.000000e+00 : f32
    %15 = vector.broadcast %cst_11 : f32 to vector<8x32xf32>
    %16 = arith.maximumf %14, %15 : vector<8x32xf32>
    %17 = arith.truncf %16 : vector<8x32xf32> to vector<8x32xbf16>
    %c0_12 = arith.constant 0 : index
    %c0_13 = arith.constant 0 : index
    %18 = vector.load %arg6[%c0_12, %c0_13] : memref<32x8xbf16, #tpu.memory_space<vmem>>, vector<32x8xbf16>
    %cst_14 = arith.constant dense<0.000000e+00> : vector<8x8xf32>
    %19 = tpu.matmul %17, %18, %cst_14 {dimension_numbers = #tpu.dot_dimension_numbers<[1], [0], [0], [1], [0, 0, 1, 1], [], []>} : vector<8x32xbf16>, vector<32x8xbf16>, vector<8x8xf32> -> vector<8x8xf32>
    %c0_15 = arith.constant 0 : index
    %c0_16 = arith.constant 0 : index
    %20 = vector.load %arg7[%c0_15, %c0_16] : memref<1x8xf32, #tpu.memory_space<vmem>>, vector<1x8xf32>
    %21 = vector.broadcast %20 : vector<1x8xf32> to vector<8x8xf32>
    %22 = arith.addf %19, %21 : vector<8x8xf32>
    %c0_17 = arith.constant 0 : index
    %c0_18 = arith.constant 0 : index
    %23 = vector.load %arg8[%c0_17, %c0_18] : memref<8x8xf32, #tpu.memory_space<vmem>>, vector<8x8xf32>
    tpu.vector_store %arg8[%c0_17, %c0_18], %22 {strides = array<i32>} : memref<8x8xf32, #tpu.memory_space<vmem>>, vector<8x8xf32>,
    return
  }
  func.func @transform_0(%arg0: i32) -> (i32, i32) {
    %c0_i32 = arith.constant 0 : i32
    %c0_i32_0 = arith.constant 0 : i32
    return %arg0, %c0_i32 : i32, i32
  }
  func.func @transform_1(%arg0: i32) -> (i32, i32) {
    %c0_i32 = arith.constant 0 : i32
    %c0_i32_0 = arith.constant 0 : i32
    %c0_i32_1 = arith.constant 0 : i32
    return %c0_i32, %c0_i32_0 : i32, i32
  }
  func.func @transform_2(%arg0: i32) -> (i32, i32) {
    %c0_i32 = arith.constant 0 : i32
    %c0_i32_0 = arith.constant 0 : i32
    %c0_i32_1 = arith.constant 0 : i32
    return %c0_i32, %c0_i32_0 : i32, i32
  }
  func.func @transform_3(%arg0: i32) -> (i32, i32) {
    %c0_i32 = arith.constant 0 : i32
    %c0_i32_0 = arith.constant 0 : i32
    %c0_i32_1 = arith.constant 0 : i32
    return %c0_i32, %c0_i32_0 : i32, i32
  }
  func.func @transform_4(%arg0: i32) -> (i32, i32) {
    %c0_i32 = arith.constant 0 : i32
    %c0_i32_0 = arith.constant 0 : i32
    %c0_i32_1 = arith.constant 0 : i32
    return %c0_i32, %c0_i32_0 : i32, i32
  }
  func.func @transform_5(%arg0: i32) -> (i32, i32) {
    %c0_i32 = arith.constant 0 : i32
    %c0_i32_0 = arith.constant 0 : i32
    %c0_i32_1 = arith.constant 0 : i32
    return %c0_i32, %c0_i32_0 : i32, i32
  }
  func.func @transform_6(%arg0: i32) -> (i32, i32) {
    %c0_i32 = arith.constant 0 : i32
    %c0_i32_0 = arith.constant 0 : i32
    %c0_i32_1 = arith.constant 0 : i32
    return %c0_i32, %c0_i32_0 : i32, i32
  }
  func.func @transform_7(%arg0: i32) -> (i32, i32) {
    %c0_i32 = arith.constant 0 : i32
    %c0_i32_0 = arith.constant 0 : i32
    return %arg0, %c0_i32 : i32, i32
  }
}

</mosaic_0001>

<llo_original>
// kernel: tpu_custom_call.1
$region0: #{tpu_custom_call.1}
  #allocation0 [shape = 'u32[]', space=smem, size = 0x4, offset = 0x4, fixed_abs, tag = 'smem constant byte address 0x4 - core index']
  #allocation1 [shape = 'u32[72,128]{1,0:T(1,128)}', space=vmem, size = 0x9000, scoped, tag = 'internal scratch']
  %s0 = inlined_call_operand.vmem [shape: f32[8,32], index: 0, kind: input, shape index: {}]
  %s1 = inlined_call_operand.vmem [shape: bf16[32,64], index: 1, kind: input, shape index: {}]
  %s2 = inlined_call_operand.vmem [shape: f32[1,64], index: 2, kind: input, shape index: {}]
  %s3 = inlined_call_operand.vmem [shape: bf16[64,32], index: 3, kind: input, shape index: {}]
  %s4 = inlined_call_operand.vmem [shape: f32[1,32], index: 4, kind: input, shape index: {}]
  %s5 = inlined_call_operand.vmem [shape: bf16[32,8], index: 5, kind: input, shape index: {}]
  %s6 = inlined_call_operand.vmem [shape: f32[1,8], index: 6, kind: input, shape index: {}]
  %s7 = inlined_call_operand.hbm [shape: f32[8,8], index: 7, kind: output, shape index: {}]
  %s8 = sld [smem:[#allocation0]]
  $region38: #{tpu_custom_call.1} parent=0
    _
  %s10 = ssub.s32 1, %s8
  %s11 = scalar_select 0, %s10, %s8
  $region1: #{tpu_custom_call.1} parent=0
    #allocation2 [shape = 'u8[4096]{0}', space=vmem, size = 0x1000, scoped, tag = 'output window, operand 0, single buffered']
    #allocation3 [shape = 's32[1]{0}', space=sflag, size = 0x4, scoped, tag = 'scoped memory for tpu_custom_call.1']
    %12 = vsyncpa [#allocation3], 0
    // Predicated region
    $region2: #{tpu_custom_call.1} parent=1 // pred_check
      _
    $region3: #{tpu_custom_call.1} parent=1 // pred_check_branch
      %14 = sbr.rel (0) target = $region5
    $region4: #{tpu_custom_call.1} parent=1 // pred_region
      _
    $region5: #{tpu_custom_call.1} parent=1 // pred_fallthru
      _
    // Predicated region
    $region6: #{tpu_custom_call.1} parent=1 // pred_check
      _
    $region7: #{tpu_custom_call.1} parent=1 // pred_check_branch
      %16 = sbr.rel (0) target = $region9
    $region8: #{tpu_custom_call.1} parent=1 // pred_region
      _
    $region9: #{tpu_custom_call.1} parent=1 // pred_fallthru
      _
    // Predicated region
    $region10: #{tpu_custom_call.1} parent=1 // pred_check
      _
    $region11: #{tpu_custom_call.1} parent=1 // pred_check_branch
      %18 = sbr.rel (0) target = $region13
    $region12: #{tpu_custom_call.1} parent=1 // pred_region
      _
    $region13: #{tpu_custom_call.1} parent=1 // pred_fallthru
      _
    // Predicated region
    $region14: #{tpu_custom_call.1} parent=1 // pred_check
      _
    $region15: #{tpu_custom_call.1} parent=1 // pred_check_branch
      %20 = sbr.rel (0) target = $region17
    $region16: #{tpu_custom_call.1} parent=1 // pred_region
      _
    $region17: #{tpu_custom_call.1} parent=1 // pred_fallthru
      _
    // Predicated region
    $region18: #{tpu_custom_call.1} parent=1 // pred_check
      _
    $region19: #{tpu_custom_call.1} parent=1 // pred_check_branch
      %22 = sbr.rel (0) target = $region21
    $region20: #{tpu_custom_call.1} parent=1 // pred_region
      _
    $region21: #{tpu_custom_call.1} parent=1 // pred_fallthru
      _
    // Predicated region
    $region22: #{tpu_custom_call.1} parent=1 // pred_check
      _
    $region23: #{tpu_custom_call.1} parent=1 // pred_check_branch
      %24 = sbr.rel (0) target = $region25
    $region24: #{tpu_custom_call.1} parent=1 // pred_region
      _
    $region25: #{tpu_custom_call.1} parent=1 // pred_fallthru
      _
    // Predicated region
    $region26: #{tpu_custom_call.1} parent=1 // pred_check
      _
    $region27: #{tpu_custom_call.1} parent=1 // pred_check_branch
      %26 = sbr.rel (0) target = $region29
    $region28: #{tpu_custom_call.1} parent=1 // pred_region
      _
    $region29: #{tpu_custom_call.1} parent=1 // pred_fallthru
      _
    %v28 = vld [vmem:[%s0] sm:$0xff]
    %v29 = vpack.c.bf16 %v28, %v28
    %v30 = vld [vmem:[%s1] sm:$0xf]
    %v31 = vld [vmem:[%s1 + $0x4] sm:$0xf]
    %v32 = vld [vmem:[%s1 + $0x8] sm:$0xf]
    %v33 = vld [vmem:[%s1 + $0xc] sm:$0xf]
    %v34 = vld [vmem:[%s2] sm:$0x1]
    %v36 = vperm.slane %v34, 0
    %v42 = vunpack.c.l.b16 %v30
    %v43 = vunpack.c.l.b16 %v31
    %v44 = vunpack.c.l.b16 %v32
    %v45 = vunpack.c.l.b16 %v33
    %v46 = vpack.c.b16 %v43, %v42
    %v47 = vpack.c.b16 %v45, %v44
    %vm50 = vcmask 261120
    %v52 = vsel %vm50, %v29, 0
    %54 = vmatpush.bf16.msra.mxu0 0
    %55 = vmatpush.bf16.msra.mxu0 0
    %56 = vmatpush.bf16.msra.mxu0 0
    %57 = vmatpush.bf16.msra.mxu0 0
    %58 = vmatpush.bf16.msra.mxu0 0
    %59 = vmatpush.bf16.msra.mxu0 0
    %60 = vmatpush.bf16.msra.mxu0 %v47
    %61 = vmatpush.bf16.msra.mxu0 %v46
    %62 = vmatmul.bf16.gmra.mxu0 %v52
    %v63 = vpop.f32.mrf.mxu0
    %v64 = vadd.f32 %v36, %v63
    %v65 = vpop.f32.mrf.mxu0
    %66 = vdwg.mxu0
    %v67 = vmax.f32 %v64, 0.0
    %v68 = vpack.c.bf16 %v67, %v67
    %v69 = vld [vmem:[%s3] sm:$0xf]
    %v70 = vld [vmem:[%s3 + $0x4] sm:$0xf]
    %v71 = vld [vmem:[%s3 + $0x8] sm:$0xf]
    %v72 = vld [vmem:[%s3 + $0xc] sm:$0xf]
    %v73 = vld [vmem:[%s3 + $0x10] sm:$0xf]
    %v74 = vld [vmem:[%s3 + $0x14] sm:$0xf]
    %v75 = vld [vmem:[%s3 + $0x18] sm:$0xf]
    %v76 = vld [vmem:[%s3 + $0x1c] sm:$0xf]
    %v77 = vld [vmem:[%s4] sm:$0x1]
    %v79 = vperm.slane %v77, 0
    %v89 = vunpack.c.l.b16 %v69
    %v90 = vunpack.c.l.b16 %v70
    %v91 = vunpack.c.l.b16 %v71
    %v92 = vunpack.c.l.b16 %v72
    %v93 = vunpack.c.l.b16 %v73
    %v94 = vunpack.c.l.b16 %v74
    %v95 = vunpack.c.l.b16 %v75
    %v96 = vunpack.c.l.b16 %v76
    %v97 = vpack.c.b16 %v90, %v89
    %v98 = vpack.c.b16 %v92, %v91
    %v99 = vpack.c.b16 %v94, %v93
    %v100 = vpack.c.b16 %v96, %v95
    %vm105 = vcmask 523264
    %v107 = vsel %vm105, %v68, 0
    %109 = vmatpush.bf16.msra.mxu0 0
    %110 = vmatpush.bf16.msra.mxu0 0
    %111 = vmatpush.bf16.msra.mxu0 0
    %112 = vmatpush.bf16.msra.mxu0 0
    %113 = vmatpush.bf16.msra.mxu0 %v100
    %114 = vmatpush.bf16.msra.mxu0 %v99
    %115 = vmatpush.bf16.msra.mxu0 %v98
    %116 = vmatpush.bf16.msra.mxu0 %v97
    %117 = vmatmul.bf16.gmra.mxu0 %v107
    %v118 = vpop.f32.mrf.mxu0
    %v119 = vadd.f32 %v79, %v118
    %v120 = vpop.f32.mrf.mxu0
    %121 = vdwg.mxu0
    %v122 = vmax.f32 %v119, 0.0
    %v123 = vpack.c.bf16 %v122, %v122
    %v124 = vld [vmem:[%s5] sm:$0xf]
    %v125 = vld [vmem:[%s5 + $0x4] sm:$0xf]
    %v126 = vld [vmem:[%s5 + $0x8] sm:$0xf]
    %v127 = vld [vmem:[%s5 + $0xc] sm:$0xf]
    %v128 = vld [vmem:[%s6] sm:$0x1]
    %v130 = vperm.slane %v128, 0
    %v136 = vunpack.c.l.b16 %v124
    %v137 = vunpack.c.l.b16 %v125
    %v138 = vunpack.c.l.b16 %v126
    %v139 = vunpack.c.l.b16 %v127
    %v140 = vpack.c.b16 %v137, %v136
    %v141 = vpack.c.b16 %v139, %v138
    %v145 = vsel %vm50, %v123, 0
    %147 = vmatpush.bf16.msra.mxu0 0
    %148 = vmatpush.bf16.msra.mxu0 0
    %149 = vmatpush.bf16.msra.mxu0 0
    %150 = vmatpush.bf16.msra.mxu0 0
    %151 = vmatpush.bf16.msra.mxu0 0
    %152 = vmatpush.bf16.msra.mxu0 0
    %153 = vmatpush.bf16.msra.mxu0 %v141
    %154 = vmatpush.bf16.msra.mxu0 %v140
    %155 = vmatmul.bf16.gmra.mxu0 %v145
    %v156 = vpop.f32.mrf.mxu0
    %v157 = vadd.f32 %v130, %v156
    %v158 = vpop.f32.mrf.mxu0
    %159 = vdwg.mxu0
    %vm160 = vcmask 64512
    %161 = vst.msk [vmem:[#allocation2] sm:$0xff] %vm160, %v157
    // Predicated region
    $region30: #{tpu_custom_call.1} parent=1 // pred_check
      _
    $region31: #{tpu_custom_call.1} parent=1 // pred_check_branch
      %163 = sbr.rel (0) target = $region33
    $region32: #{tpu_custom_call.1} parent=1 // pred_region
      %165 = vsyncadd [#allocation3], 0
      %s167 = sshll.u32 [#allocation2], 4
      %s168 = int_to_ptr.vmem [resolvable:$true] %s167
      %s169 = sshll.u32 %s7, 4
      %s170 = int_to_ptr.hbm [resolvable:$true] %s169
      %172 = dma.vmem_to_hbm [thread:$0]  %s168, 128, %s170, [#allocation3]
    $region33: #{tpu_custom_call.1} parent=1 // pred_fallthru
      _
    // Predicated region
    $region34: #{tpu_custom_call.1} parent=1 // pred_check
      _
    $region35: #{tpu_custom_call.1} parent=1 // pred_check_branch
      %174 = sbr.rel (0) target = $region37
    $region36: #{tpu_custom_call.1} parent=1 // pred_region
      %176 = dma.done [#allocation3], 128
    $region37: #{tpu_custom_call.1} parent=1 // pred_fallthru
      _
    %177 = vsyncpa [#allocation3], 1

</llo_original>
